<compile_context>
chip_gen: v7x
topology: tpu7x:2x2x1
jax: 0.10.0
libtpu: 0.0.40
codegen_flags: <defaults>
</compile_context>

<pallas_src>
import math

import jax
import jax.numpy as jnp
from jax import lax
from jax.experimental import pallas as pl
from jax.experimental.pallas import tpu as pltpu


def _round_up(n, m):
    return ((n + m - 1) // m) * m


def _make_rnn_kernel_t1(num_layers: int):
    """seq_len == 1 fast path: no proj/act scratch, h lives entirely in vregs."""

    def kernel(*refs):
        # refs = [x, h0, (w_ih, w_hh, b) * L, w_fc, b_fc, out, h_out]
        x_ref, h0_ref = refs[0], refs[1]
        p = 2
        layer_refs = []
        for _ in range(num_layers):
            layer_refs.append(refs[p:p + 3])
            p += 3
        w_fc_ref, b_fc_ref = refs[p], refs[p + 1]
        out_ref, h_out_ref = refs[p + 2], refs[p + 3]

        xin = x_ref[0]                                  # (TB, Ip) bf16
        for l in range(num_layers):
            w_ih_ref, w_hh_ref, b_ref = layer_refs[l]
            pre = (jnp.dot(xin, w_ih_ref[...], preferred_element_type=jnp.float32)
                   + jnp.dot(h0_ref[l].astype(jnp.bfloat16), w_hh_ref[...],
                             preferred_element_type=jnp.float32)
                   + b_ref[...])                        # f32 bias (b_ih + b_hh fused)
            h_new = jnp.tanh(pre)                       # f32 tanh (v5e: no bf16 EUP)
            h_out_ref[l] = h_new
            xin = h_new.astype(jnp.bfloat16)            # next-layer / fc-head input
            # TODO(synk): nn.RNN applies dropout(p=0.5) between layers only in training
            # mode; eval-mode (no dropout) semantics are implemented here.

        # Fused Linear head (T == 1): out = h_L @ W_fc + b_fc.
        out_ref[...] = b_fc_ref[...] + jnp.dot(
            xin, w_fc_ref[0], preferred_element_type=jnp.float32)

    return kernel


def _make_rnn_kernel(num_layers: int, seq_len: int, unroll: bool):
    """General path: hoisted input projection + serial recurrence via VMEM scratch."""

    def kernel(*refs):
        # refs = [x, h0, (w_ih, w_hh, b)*L, w_fc, b_fc, out, h_out, proj_scr, act_scr]
        x_ref, h0_ref = refs[0], refs[1]
        p = 2
        layer_refs = []
        for _ in range(num_layers):
            layer_refs.append(refs[p:p + 3])
            p += 3
        w_fc_ref, b_fc_ref = refs[p], refs[p + 1]
        out_ref, h_out_ref = refs[p + 2], refs[p + 3]
        proj_ref, act_ref = refs[p + 4], refs[p + 5]    # f32 proj, bf16 layer outputs

        T, TB, Hp = proj_ref.shape

        for l in range(num_layers):
            w_ih_ref, w_hh_ref, b_ref = layer_refs[l]
            w_hh = w_hh_ref[...]                        # (Hp, Hp) bf16
            b = b_ref[...]                              # (1, Hp)  f32 (b_ih + b_hh fused)

            # --- Hoisted input projection for ALL timesteps: one big MXU matmul. ---
            xin = x_ref[...] if l == 0 else act_ref[...]     # bf16 (T, TB, in_dim)
            in_dim = xin.shape[-1]
            proj = jnp.dot(xin.reshape(T * TB, in_dim), w_ih_ref[...],
                           preferred_element_type=jnp.float32)
            proj_ref[...] = (proj + b).reshape(T, TB, Hp)

            # --- Serial recurrence: only h @ W_hh + tanh on the critical path. ---
            # TODO(synk): for T >> 8 pin W_hh in the MXU weight registers once per layer
            # via pltpu.matmul_push_rhs / matmul_acc_lhs instead of re-issuing jnp.dot.
            def step(t, h):
                pre = proj_ref[t] + jnp.dot(h.astype(jnp.bfloat16), w_hh,
                                            preferred_element_type=jnp.float32)
                h_new = jnp.tanh(pre)                   # f32 carry for accuracy
                act_ref[t] = h_new.astype(jnp.bfloat16)  # bf16 scratch store
                return h_new

            h_final = lax.fori_loop(0, seq_len, step, h0_ref[l], unroll=unroll)
            h_out_ref[l] = h_final
            # TODO(synk): eval-mode semantics; train-mode inter-layer dropout omitted.

        # --- Fused Linear head: equivalent to r_out.reshape(B, T*H) @ W_fc + b_fc. ---
        acc = jnp.broadcast_to(b_fc_ref[...], out_ref.shape).astype(jnp.float32)
        for t in range(seq_len):
            acc = acc + jnp.dot(act_ref[t], w_fc_ref[t],
                                preferred_element_type=jnp.float32)
        out_ref[...] = acc

    return kernel


def _const_spec(shape):
    """VMEM-resident operand: constant index_map + single buffer (no double-buffering)."""
    nd = len(shape)
    return pl.BlockSpec(shape, lambda *_: (0,) * nd, pipeline_mode=pl.Buffered(1))


def rnn_forward(x, hidden, params, *, batch_tile=128):
    """Pallas wrapper. x: (B, T, I) f32 (batch_first), hidden: (L, B, H) f32."""
    B, T, I = x.shape
    L, _, H = hidden.shape
    O = params["b_fc"].shape[-1]

    # Lane/sublane-friendly padded sizes.
    Ip = _round_up(I, 128)
    Hp = _round_up(H, 128)
    Op = _round_up(O, 128)

    TB = min(_round_up(B, 8), _round_up(batch_tile, 8))   # batch tile (grid axis)
    if B >= 16:
        # Prefer >= 2 grid steps so a 2-TensorCore chip (v7x) can shard the batch axis.
        TB = min(TB, _round_up(pl.cdiv(B, 2), 8))
    Bp = _round_up(B, TB)

    # Time-major, padded activations (bf16 input stream halves HBM->VMEM bytes).
    xp = jnp.zeros((T, Bp, Ip), jnp.bfloat16).at[:, :B, :I].set(
        jnp.transpose(x, (1, 0, 2)).astype(jnp.bfloat16))
    h0p = jnp.zeros((L, Bp, Hp), jnp.float32).at[:, :B, :H].set(hidden)

    # Padded, bf16 weights; fused f32 biases. Zero-padding keeps padded hidden channels
    # identically zero through tanh, so results match the unpadded math.
    w_ih_p, w_hh_p, b_p = [], [], []
    for l in range(L):
        in_dim = I if l == 0 else H
        in_dim_p = Ip if l == 0 else Hp
        w_ih_p.append(jnp.zeros((in_dim_p, Hp), jnp.bfloat16).at[:in_dim, :H].set(
            params["w_ih"][l].astype(jnp.bfloat16)))
        w_hh_p.append(jnp.zeros((Hp, Hp), jnp.bfloat16).at[:H, :H].set(
            params["w_hh"][l].astype(jnp.bfloat16)))
        b_p.append(jnp.zeros((1, Hp), jnp.float32).at[:, :H].set(
            params["b_ih"][l] + params["b_hh"][l]))
    w_fc_p = jnp.zeros((T, Hp, Op), jnp.bfloat16).at[:, :H, :O].set(
        params["w_fc"].astype(jnp.bfloat16))
    b_fc_p = jnp.zeros((1, Op), jnp.float32).at[:, :O].set(params["b_fc"])

    inputs = [xp, h0p]
    in_specs = [
        pl.BlockSpec((T, TB, Ip), lambda i: (0, i, 0)),       # streamed per batch tile
        pl.BlockSpec((L, TB, Hp), lambda i: (0, i, 0)),
    ]
    for l in range(L):
        inputs += [w_ih_p[l], w_hh_p[l], b_p[l]]
        in_specs += [_const_spec(w_ih_p[l].shape),            # weights: VMEM-resident,
                     _const_spec((Hp, Hp)),                   # single-buffered
                     _const_spec((1, Hp))]
    inputs += [w_fc_p, b_fc_p]
    in_specs += [_const_spec((T, Hp, Op)), _const_spec((1, Op))]

    out_shapes = (jax.ShapeDtypeStruct((Bp, Op), jnp.float32),
                  jax.ShapeDtypeStruct((L, Bp, Hp), jnp.float32))
    out_specs = (pl.BlockSpec((TB, Op), lambda i: (i, 0)),
                 pl.BlockSpec((L, TB, Hp), lambda i: (0, i, 0)))

    # T == 1 fast path needs no scratch; general path: f32 proj + bf16 layer outputs.
    if T == 1:
        scratch_shapes = []
        kernel = _make_rnn_kernel_t1(L)
    else:
        scratch_shapes = [pltpu.VMEM((T, TB, Hp), jnp.float32),    # proj scratch (f32)
                          pltpu.VMEM((T, TB, Hp), jnp.bfloat16)]   # layer-output scratch
        unroll = (T <= 8) and (TB * Hp <= 16 * 1024)
        kernel = _make_rnn_kernel(L, T, unroll)

    # VMEM budget: single-buffered weights + double-buffered activation tiles + scratch.
    weight_bytes = (sum(w.size * 2 for w in w_ih_p) + sum(w.size * 2 for w in w_hh_p)
                    + sum(b.size * 4 for b in b_p) + w_fc_p.size * 2 + b_fc_p.size * 4)
    stream_bytes = 2 * (T * TB * Ip * 2 + L * TB * Hp * 4
                        + TB * Op * 4 + L * TB * Hp * 4)
    scratch_bytes = (T * TB * Hp * (4 + 2)) if T > 1 else 0
    vmem_limit = min(100 * 2**20,
                     max(32 * 2**20,
                         int(1.5 * (weight_bytes + stream_bytes + scratch_bytes))))

    # Advisory cost hint for the XLA scheduler.
    flops = (2 * T * Bp * Ip * Hp                     # layer-0 input projection
             + 2 * T * Bp * Hp * Hp * (L - 1)         # deeper-layer input projections
             + 2 * T * Bp * Hp * Hp * L               # recurrent h @ W_hh
             + 2 * T * Bp * Hp * Op)                  # fc head
    transcendentals = L * T * Bp * Hp
    bytes_accessed = (xp.size * 2 + h0p.size * 4 + weight_bytes
                      + Bp * Op * 4 + L * Bp * Hp * 4)

    out_p, h_out_p = pl.pallas_call(
        kernel,
        out_shape=out_shapes,
        grid_spec=pltpu.PrefetchScalarGridSpec(
            num_scalar_prefetch=0,
            grid=(Bp // TB,),
            in_specs=in_specs,
            out_specs=out_specs,
            scratch_shapes=scratch_shapes,
        ),
        compiler_params=pltpu.CompilerParams(
            dimension_semantics=("parallel",),
            vmem_limit_bytes=int(vmem_limit)),
        cost_estimate=pl.CostEstimate(flops=int(flops),
                                      transcendentals=int(transcendentals),
                                      bytes_accessed=int(bytes_accessed)),
    )(*inputs)

    return out_p[:B, :O], h_out_p[:, :B, :H]


def init_params(key, input_size, hidden_size, output_size, num_layers, seq_len):
    """Deterministic init matching the PyTorch module's parameter shapes
    (weights stored pre-transposed for x @ W)."""
    k = 1.0 / math.sqrt(hidden_size)
    keys = jax.random.split(key, 4 * num_layers + 2)
    w_ih, w_hh, b_ih, b_hh = [], [], [], []
    idx = 0
    for l in range(num_layers):
        in_dim = input_size if l == 0 else hidden_size
        w_ih.append(jax.random.uniform(keys[idx], (in_dim, hidden_size),
                                       jnp.float32, -k, k)); idx += 1
        w_hh.append(jax.random.uniform(keys[idx], (hidden_size, hidden_size),
                                       jnp.float32, -k, k)); idx += 1
        b_ih.append(jax.random.uniform(keys[idx], (1, hidden_size),
                                       jnp.float32, -k, k)); idx += 1
        b_hh.append(jax.random.uniform(keys[idx], (1, hidden_size),
                                       jnp.float32, -k, k)); idx += 1
    fc_in = seq_len * hidden_size   # PyTorch fc(in_features=hidden_size) => seq_len == 1
    kf = 1.0 / math.sqrt(fc_in)
    w_fc = jax.random.uniform(keys[idx], (seq_len, hidden_size, output_size),
                              jnp.float32, -kf, kf); idx += 1
    b_fc = jax.random.uniform(keys[idx], (1, output_size), jnp.float32, -kf, kf)
    return dict(w_ih=w_ih, w_hh=w_hh, b_ih=b_ih, b_hh=b_hh, w_fc=w_fc, b_fc=b_fc)


def rnn_forward_ref(x, hidden, params):
    """Pure-JAX f32 reference (eval-mode nn.RNN + Linear)."""
    B, T, _ = x.shape
    L, _, H = hidden.shape
    cur = x
    h_out = []
    for l in range(L):
        h = hidden[l]
        outs = []
        for t in range(T):
            h = jnp.tanh(cur[:, t, :] @ params["w_ih"][l]
                         + h @ params["w_hh"][l]
                         + params["b_ih"][l] + params["b_hh"][l])
            outs.append(h)
        cur = jnp.stack(outs, axis=1)
        h_out.append(h)
    flat = cur.reshape(B, T * H)
    w_fc = params["w_fc"].reshape(T * H, -1)
    out = flat @ w_fc + params["b_fc"]
    return out, jnp.stack(h_out, axis=0)


if __name__ == "__main__":
    INPUT_SIZE, HIDDEN_SIZE, OUTPUT_SIZE, NUM_LAYERS = 16, 32, 10, 2
    BATCH, SEQ = 2, 1   # seq=1 is what the module's view(B,-1) + fc(hidden_size) implies

    key = jax.random.PRNGKey(0)
    kx, kh, kp = jax.random.split(key, 3)

    # --- Primary check: the exact module configuration (T == 1 fast path). ---
    x = jax.random.normal(kx, (BATCH, SEQ, INPUT_SIZE), jnp.float32)
    hidden = jax.random.normal(kh, (NUM_LAYERS, BATCH, HIDDEN_SIZE), jnp.float32)
    params = init_params(kp, INPUT_SIZE, HIDDEN_SIZE, OUTPUT_SIZE, NUM_LAYERS, SEQ)

    out, h_n = rnn_forward(x, hidden, params)
    out = jax.block_until_ready(out)
    h_n = jax.block_until_ready(h_n)

    out_ref, h_ref = rnn_forward_ref(x, hidden, params)
    assert out.shape == (BATCH, OUTPUT_SIZE)
    assert h_n.shape == (NUM_LAYERS, BATCH, HIDDEN_SIZE)
    # bf16 MXU inputs with f32 accumulation -> compare against f32 ref at bf16 tolerance.
    assert jnp.allclose(out, out_ref, atol=2e-2, rtol=2e-2)
    assert jnp.allclose(h_n, h_ref, atol=2e-2, rtol=2e-2)

    # --- Secondary check: general T > 1 path (bf16 act scratch, 2-step batch grid). ---
    B2, T2 = 16, 4
    x2 = jax.random.normal(jax.random.PRNGKey(1), (B2, T2, INPUT_SIZE), jnp.float32)
    h2 = jax.random.normal(jax.random.PRNGKey(2), (NUM_LAYERS, B2, HIDDEN_SIZE),
                           jnp.float32)
    params2 = init_params(jax.random.PRNGKey(3), INPUT_SIZE, HIDDEN_SIZE,
                          OUTPUT_SIZE, NUM_LAYERS, T2)
    out2, hn2 = rnn_forward(x2, h2, params2)
    out2 = jax.block_until_ready(out2)
    hn2 = jax.block_until_ready(hn2)
    out2_ref, hn2_ref = rnn_forward_ref(x2, h2, params2)
    assert jnp.allclose(out2, out2_ref, atol=2e-2, rtol=2e-2)
    assert jnp.allclose(hn2, hn2_ref, atol=2e-2, rtol=2e-2)

    print("KERNEL_OK")
</pallas_src>

<mosaic_0001>
module attributes {stable_mosaic.version = 11 : i64} {
  func.func @kernel(%arg0: i32, %arg1: memref<1x8x128xbf16, #tpu.memory_space<vmem>>, %arg2: memref<2x8x128xf32, #tpu.memory_space<vmem>>, %arg3: memref<128x128xbf16, #tpu.memory_space<vmem>>, %arg4: memref<128x128xbf16, #tpu.memory_space<vmem>>, %arg5: memref<1x128xf32, #tpu.memory_space<vmem>>, %arg6: memref<128x128xbf16, #tpu.memory_space<vmem>>, %arg7: memref<128x128xbf16, #tpu.memory_space<vmem>>, %arg8: memref<1x128xf32, #tpu.memory_space<vmem>>, %arg9: memref<1x128x128xbf16, #tpu.memory_space<vmem>>, %arg10: memref<1x128xf32, #tpu.memory_space<vmem>>, %arg11: memref<8x128xf32, #tpu.memory_space<vmem>>, %arg12: memref<2x8x128xf32, #tpu.memory_space<vmem>>) attributes {dimension_semantics = [#tpu.dimension_semantics<parallel>], iteration_bounds = array<i64: 1>, scalar_prefetch = 0 : i64, scratch_operands = 0 : i64, tpu.core_type = #tpu.core_type<tc>, window_params = [{transform_indices = @transform_0, window_bounds = array<i64: 1, 8, 128>}, {transform_indices = @transform_1, window_bounds = array<i64: 2, 8, 128>}, {pipeline_mode = #tpu.pipeline_mode<synchronous>, transform_indices = @transform_2, window_bounds = array<i64: 128, 128>}, {pipeline_mode = #tpu.pipeline_mode<synchronous>, transform_indices = @transform_3, window_bounds = array<i64: 128, 128>}, {pipeline_mode = #tpu.pipeline_mode<synchronous>, transform_indices = @transform_4, window_bounds = array<i64: 1, 128>}, {pipeline_mode = #tpu.pipeline_mode<synchronous>, transform_indices = @transform_5, window_bounds = array<i64: 128, 128>}, {pipeline_mode = #tpu.pipeline_mode<synchronous>, transform_indices = @transform_6, window_bounds = array<i64: 128, 128>}, {pipeline_mode = #tpu.pipeline_mode<synchronous>, transform_indices = @transform_7, window_bounds = array<i64: 1, 128>}, {pipeline_mode = #tpu.pipeline_mode<synchronous>, transform_indices = @transform_8, window_bounds = array<i64: 1, 128, 128>}, {pipeline_mode = #tpu.pipeline_mode<synchronous>, transform_indices = @transform_9, window_bounds = array<i64: 1, 128>}, {transform_indices = @transform_10, window_bounds = array<i64: 8, 128>}, {transform_indices = @transform_11, window_bounds = array<i64: 2, 8, 128>}]} {
    %c0 = arith.constant 0 : index
    %c0_0 = arith.constant 0 : index
    %c0_1 = arith.constant 0 : index
    %0 = vector.load %arg1[%c0, %c0_0, %c0_1] : memref<1x8x128xbf16, #tpu.memory_space<vmem>>, vector<1x8x128xbf16>
    %1 = vector.shape_cast %0 : vector<1x8x128xbf16> to vector<8x128xbf16>
    %c0_2 = arith.constant 0 : index
    %c0_3 = arith.constant 0 : index
    %2 = vector.load %arg3[%c0_2, %c0_3] : memref<128x128xbf16, #tpu.memory_space<vmem>>, vector<128x128xbf16>
    %cst = arith.constant dense<0.000000e+00> : vector<8x128xf32>
    %3 = tpu.matmul %1, %2, %cst {dimension_numbers = #tpu.dot_dimension_numbers<[1], [0], [0], [1], [0, 0, 1, 1], [], []>} : vector<8x128xbf16>, vector<128x128xbf16>, vector<8x128xf32> -> vector<8x128xf32>
    %c0_4 = arith.constant 0 : index
    %c0_5 = arith.constant 0 : index
    %c0_6 = arith.constant 0 : index
    %4 = vector.load %arg2[%c0_4, %c0_5, %c0_6] : memref<2x8x128xf32, #tpu.memory_space<vmem>>, vector<1x8x128xf32>
    %5 = vector.shape_cast %4 : vector<1x8x128xf32> to vector<8x128xf32>
    %6 = arith.truncf %5 : vector<8x128xf32> to vector<8x128xbf16>
    %c0_7 = arith.constant 0 : index
    %c0_8 = arith.constant 0 : index
    %7 = vector.load %arg4[%c0_7, %c0_8] : memref<128x128xbf16, #tpu.memory_space<vmem>>, vector<128x128xbf16>
    %cst_9 = arith.constant dense<0.000000e+00> : vector<8x128xf32>
    %8 = tpu.matmul %6, %7, %cst_9 {dimension_numbers = #tpu.dot_dimension_numbers<[1], [0], [0], [1], [0, 0, 1, 1], [], []>} : vector<8x128xbf16>, vector<128x128xbf16>, vector<8x128xf32> -> vector<8x128xf32>
    %9 = arith.addf %3, %8 : vector<8x128xf32>
    %c0_10 = arith.constant 0 : index
    %c0_11 = arith.constant 0 : index
    %10 = vector.load %arg5[%c0_10, %c0_11] : memref<1x128xf32, #tpu.memory_space<vmem>>, vector<1x128xf32>
    %11 = vector.broadcast %10 : vector<1x128xf32> to vector<8x128xf32>
    %12 = arith.addf %9, %11 : vector<8x128xf32>
    %13 = math.tanh %12 : vector<8x128xf32>
    %c0_12 = arith.constant 0 : index
    %c0_13 = arith.constant 0 : index
    %c0_14 = arith.constant 0 : index
    %14 = vector.load %arg12[%c0_12, %c0_13, %c0_14] : memref<2x8x128xf32, #tpu.memory_space<vmem>>, vector<1x8x128xf32>
    %15 = vector.shape_cast %14 : vector<1x8x128xf32> to vector<8x128xf32>
    %16 = vector.shape_cast %13 : vector<8x128xf32> to vector<1x8x128xf32>
    tpu.vector_store %arg12[%c0_12, %c0_13, %c0_14], %16 {strides = array<i32>} : memref<2x8x128xf32, #tpu.memory_space<vmem>>, vector<1x8x128xf32>,
    %17 = arith.truncf %13 : vector<8x128xf32> to vector<8x128xbf16>
    %c0_15 = arith.constant 0 : index
    %c0_16 = arith.constant 0 : index
    %18 = vector.load %arg6[%c0_15, %c0_16] : memref<128x128xbf16, #tpu.memory_space<vmem>>, vector<128x128xbf16>
    %cst_17 = arith.constant dense<0.000000e+00> : vector<8x128xf32>
    %19 = tpu.matmul %17, %18, %cst_17 {dimension_numbers = #tpu.dot_dimension_numbers<[1], [0], [0], [1], [0, 0, 1, 1], [], []>} : vector<8x128xbf16>, vector<128x128xbf16>, vector<8x128xf32> -> vector<8x128xf32>
    %c1 = arith.constant 1 : index
    %c0_18 = arith.constant 0 : index
    %c0_19 = arith.constant 0 : index
    %20 = vector.load %arg2[%c1, %c0_18, %c0_19] : memref<2x8x128xf32, #tpu.memory_space<vmem>>, vector<1x8x128xf32>
    %21 = vector.shape_cast %20 : vector<1x8x128xf32> to vector<8x128xf32>
    %22 = arith.truncf %21 : vector<8x128xf32> to vector<8x128xbf16>
    %c0_20 = arith.constant 0 : index
    %c0_21 = arith.constant 0 : index
    %23 = vector.load %arg7[%c0_20, %c0_21] : memref<128x128xbf16, #tpu.memory_space<vmem>>, vector<128x128xbf16>
    %cst_22 = arith.constant dense<0.000000e+00> : vector<8x128xf32>
    %24 = tpu.matmul %22, %23, %cst_22 {dimension_numbers = #tpu.dot_dimension_numbers<[1], [0], [0], [1], [0, 0, 1, 1], [], []>} : vector<8x128xbf16>, vector<128x128xbf16>, vector<8x128xf32> -> vector<8x128xf32>
    %25 = arith.addf %19, %24 : vector<8x128xf32>
    %c0_23 = arith.constant 0 : index
    %c0_24 = arith.constant 0 : index
    %26 = vector.load %arg8[%c0_23, %c0_24] : memref<1x128xf32, #tpu.memory_space<vmem>>, vector<1x128xf32>
    %27 = vector.broadcast %26 : vector<1x128xf32> to vector<8x128xf32>
    %28 = arith.addf %25, %27 : vector<8x128xf32>
    %29 = math.tanh %28 : vector<8x128xf32>
    %c1_25 = arith.constant 1 : index
    %c0_26 = arith.constant 0 : index
    %c0_27 = arith.constant 0 : index
    %30 = vector.load %arg12[%c1_25, %c0_26, %c0_27] : memref<2x8x128xf32, #tpu.memory_space<vmem>>, vector<1x8x128xf32>
    %31 = vector.shape_cast %30 : vector<1x8x128xf32> to vector<8x128xf32>
    %32 = vector.shape_cast %29 : vector<8x128xf32> to vector<1x8x128xf32>
    tpu.vector_store %arg12[%c1_25, %c0_26, %c0_27], %32 {strides = array<i32>} : memref<2x8x128xf32, #tpu.memory_space<vmem>>, vector<1x8x128xf32>,
    %33 = arith.truncf %29 : vector<8x128xf32> to vector<8x128xbf16>
    %c0_28 = arith.constant 0 : index
    %c0_29 = arith.constant 0 : index
    %34 = vector.load %arg10[%c0_28, %c0_29] : memref<1x128xf32, #tpu.memory_space<vmem>>, vector<1x128xf32>
    %c0_30 = arith.constant 0 : index
    %c0_31 = arith.constant 0 : index
    %c0_32 = arith.constant 0 : index
    %35 = vector.load %arg9[%c0_30, %c0_31, %c0_32] : memref<1x128x128xbf16, #tpu.memory_space<vmem>>, vector<1x128x128xbf16>
    %36 = vector.shape_cast %35 : vector<1x128x128xbf16> to vector<128x128xbf16>
    %cst_33 = arith.constant dense<0.000000e+00> : vector<8x128xf32>
    %37 = tpu.matmul %33, %36, %cst_33 {dimension_numbers = #tpu.dot_dimension_numbers<[1], [0], [0], [1], [0, 0, 1, 1], [], []>} : vector<8x128xbf16>, vector<128x128xbf16>, vector<8x128xf32> -> vector<8x128xf32>
    %38 = vector.broadcast %34 : vector<1x128xf32> to vector<8x128xf32>
    %39 = arith.addf %38, %37 : vector<8x128xf32>
    %c0_34 = arith.constant 0 : index
    %c0_35 = arith.constant 0 : index
    %40 = vector.load %arg11[%c0_34, %c0_35] : memref<8x128xf32, #tpu.memory_space<vmem>>, vector<8x128xf32>
    tpu.vector_store %arg11[%c0_34, %c0_35], %39 {strides = array<i32>} : memref<8x128xf32, #tpu.memory_space<vmem>>, vector<8x128xf32>,
    return
  }
  func.func @transform_0(%arg0: i32) -> (i32, i32, i32) {
    %c0_i32 = arith.constant 0 : i32
    %c0_i32_0 = arith.constant 0 : i32
    %c0_i32_1 = arith.constant 0 : i32
    return %c0_i32, %arg0, %c0_i32_0 : i32, i32, i32
  }
  func.func @transform_1(%arg0: i32) -> (i32, i32, i32) {
    %c0_i32 = arith.constant 0 : i32
    %c0_i32_0 = arith.constant 0 : i32
    %c0_i32_1 = arith.constant 0 : i32
    return %c0_i32, %arg0, %c0_i32_0 : i32, i32, i32
  }
  func.func @transform_2(%arg0: i32) -> (i32, i32) {
    %c0_i32 = arith.constant 0 : i32
    %c0_i32_0 = arith.constant 0 : i32
    %c0_i32_1 = arith.constant 0 : i32
    return %c0_i32, %c0_i32_0 : i32, i32
  }
  func.func @transform_3(%arg0: i32) -> (i32, i32) {
    %c0_i32 = arith.constant 0 : i32
    %c0_i32_0 = arith.constant 0 : i32
    %c0_i32_1 = arith.constant 0 : i32
    return %c0_i32, %c0_i32_0 : i32, i32
  }
  func.func @transform_4(%arg0: i32) -> (i32, i32) {
    %c0_i32 = arith.constant 0 : i32
    %c0_i32_0 = arith.constant 0 : i32
    %c0_i32_1 = arith.constant 0 : i32
    return %c0_i32, %c0_i32_0 : i32, i32
  }
  func.func @transform_5(%arg0: i32) -> (i32, i32) {
    %c0_i32 = arith.constant 0 : i32
    %c0_i32_0 = arith.constant 0 : i32
    %c0_i32_1 = arith.constant 0 : i32
    return %c0_i32, %c0_i32_0 : i32, i32
  }
  func.func @transform_6(%arg0: i32) -> (i32, i32) {
    %c0_i32 = arith.constant 0 : i32
    %c0_i32_0 = arith.constant 0 : i32
    %c0_i32_1 = arith.constant 0 : i32
    return %c0_i32, %c0_i32_0 : i32, i32
  }
  func.func @transform_7(%arg0: i32) -> (i32, i32) {
    %c0_i32 = arith.constant 0 : i32
    %c0_i32_0 = arith.constant 0 : i32
    %c0_i32_1 = arith.constant 0 : i32
    return %c0_i32, %c0_i32_0 : i32, i32
  }
  func.func @transform_8(%arg0: i32) -> (i32, i32, i32) {
    %c0_i32 = arith.constant 0 : i32
    %c0_i32_0 = arith.constant 0 : i32
    %c0_i32_1 = arith.constant 0 : i32
    %c0_i32_2 = arith.constant 0 : i32
    return %c0_i32, %c0_i32_0, %c0_i32_1 : i32, i32, i32
  }
  func.func @transform_9(%arg0: i32) -> (i32, i32) {
    %c0_i32 = arith.constant 0 : i32
    %c0_i32_0 = arith.constant 0 : i32
    %c0_i32_1 = arith.constant 0 : i32
    return %c0_i32, %c0_i32_0 : i32, i32
  }
  func.func @transform_10(%arg0: i32) -> (i32, i32) {
    %c0_i32 = arith.constant 0 : i32
    %c0_i32_0 = arith.constant 0 : i32
    return %arg0, %c0_i32 : i32, i32
  }
  func.func @transform_11(%arg0: i32) -> (i32, i32, i32) {
    %c0_i32 = arith.constant 0 : i32
    %c0_i32_0 = arith.constant 0 : i32
    %c0_i32_1 = arith.constant 0 : i32
    return %c0_i32, %arg0, %c0_i32_0 : i32, i32, i32
  }
}

</mosaic_0001>

<llo_original>
// kernel: tpu_custom_call.1
$region0: #{tpu_custom_call.1}
  #allocation0 [shape = 'u32[]', space=smem, size = 0x4, offset = 0x4, fixed_abs, tag = 'smem constant byte address 0x4 - core index']
  #allocation1 [shape = 'u32[144,128]{1,0:T(1,128)}', space=vmem, size = 0x12000, scoped, tag = 'internal scratch']
  %s0 = inlined_call_operand.hbm [shape: bf16[1,8,128], index: 0, kind: input, shape index: {}]
  %s1 = inlined_call_operand.hbm [shape: f32[2,8,128], index: 1, kind: input, shape index: {}]
  %s2 = inlined_call_operand.hbm [shape: bf16[128,128], index: 2, kind: input, shape index: {}]
  %s3 = inlined_call_operand.hbm [shape: bf16[128,128], index: 3, kind: input, shape index: {}]
  %s4 = inlined_call_operand.vmem [shape: f32[1,128], index: 4, kind: input, shape index: {}]
  %s5 = inlined_call_operand.hbm [shape: bf16[128,128], index: 5, kind: input, shape index: {}]
  %s6 = inlined_call_operand.hbm [shape: bf16[128,128], index: 6, kind: input, shape index: {}]
  %s7 = inlined_call_operand.vmem [shape: f32[1,128], index: 7, kind: input, shape index: {}]
  %s8 = inlined_call_operand.hbm [shape: bf16[1,128,128], index: 8, kind: input, shape index: {}]
  %s9 = inlined_call_operand.vmem [shape: f32[1,128], index: 9, kind: input, shape index: {}]
  %s10 = inlined_call_operand.hbm [shape: f32[8,128], index: 10, kind: output, shape index: {0}]
  %s11 = inlined_call_operand.hbm [shape: f32[2,8,128], index: 11, kind: output, shape index: {1}]
  %12 = xla_tuple %s10, %s11
  %s13 = sld [smem:[#allocation0]]
  $region86: #{tpu_custom_call.1} parent=0
    _
  %s15 = ssub.s32 1, %s13
  %s16 = scalar_select 0, %s15, %s13
  $region1: #{tpu_custom_call.1} parent=0
    #allocation2 [shape = 'u8[2048]{0}', space=vmem, size = 0x800, scoped, tag = 'input window, operand 0, single buffered']
    #allocation3 [shape = 's32[1]{0}', space=sflag, size = 0x4, scoped, tag = 'scoped memory for tpu_custom_call.1']
    #allocation4 [shape = 's32[1]{0}', space=sflag, size = 0x4, scoped, tag = 'scoped memory for tpu_custom_call.1']
    #allocation5 [shape = 'u8[8192]{0}', space=vmem, size = 0x2000, scoped, tag = 'input window, operand 1, single buffered']
    #allocation6 [shape = 's32[1]{0}', space=sflag, size = 0x4, scoped, tag = 'scoped memory for tpu_custom_call.1']
    #allocation7 [shape = 'u8[32768]{0}', space=vmem, size = 0x8000, scoped, tag = 'input window, operand 2, single buffered']
    #allocation8 [shape = 'u8[32768]{0}', space=vmem, size = 0x8000, scoped, tag = 'input window, operand 3, single buffered']
    #allocation9 [shape = 's32[1]{0}', space=sflag, size = 0x4, scoped, tag = 'scoped memory for tpu_custom_call.1']
    #allocation10 [shape = 'u8[32768]{0}', space=vmem, size = 0x8000, scoped, tag = 'input window, operand 5, single buffered']
    #allocation11 [shape = 'u8[32768]{0}', space=vmem, size = 0x8000, scoped, tag = 'input window, operand 6, single buffered']
    #allocation12 [shape = 's32[1]{0}', space=sflag, size = 0x4, scoped, tag = 'scoped memory for tpu_custom_call.1']
    #allocation13 [shape = 'u8[32768]{0}', space=vmem, size = 0x8000, scoped, tag = 'input window, operand 8, single buffered']
    #allocation14 [shape = 'u8[4096]{0}', space=vmem, size = 0x1000, scoped, tag = 'output window, operand 0, single buffered']
    #allocation15 [shape = 'u8[8192]{0}', space=vmem, size = 0x2000, scoped, tag = 'output window, operand 1, single buffered']
    #allocation16 [shape = 's32[1]{0}', space=sflag, size = 0x4, scoped, tag = 'scoped memory for tpu_custom_call.1']
    %17 = vsyncpa [#allocation3], 0
    %18 = vsyncpa [#allocation6], 0
    %19 = vsyncpa [#allocation9], 0
    %20 = vsyncpa [#allocation12], 0
    %21 = vsyncpa [#allocation4], 0
    %22 = vsyncpa [#allocation16], 0
    // Predicated region
    $region2: #{tpu_custom_call.1} parent=1 // pred_check
      _
    $region3: #{tpu_custom_call.1} parent=1 // pred_check_branch
      %24 = sbr.rel (0) target = $region5
    $region4: #{tpu_custom_call.1} parent=1 // pred_region
      %s26 = ssub.s32 64, 64
      %27 = vsyncadd [#allocation3], %s26
      %s29 = sshll.u32 [#allocation2], 4
      %s30 = int_to_ptr.vmem [resolvable:$true] %s29
      %32 = dma.hbm_to_vmem [thread:$0]  %s0, 64, %s30, [#allocation3]
    $region5: #{tpu_custom_call.1} parent=1 // pred_fallthru
      _
    // Predicated region
    $region6: #{tpu_custom_call.1} parent=1 // pred_check
      _
    $region7: #{tpu_custom_call.1} parent=1 // pred_check_branch
      %34 = sbr.rel (0) target = $region9
    $region8: #{tpu_custom_call.1} parent=1 // pred_region
      %s36 = ssub.s32 256, 256
      %37 = vsyncadd [#allocation6], %s36
      %s38 = sshll.u32 [#allocation5], 4
      %s39 = int_to_ptr.vmem [resolvable:$true] %s38
      %44 = dma.hbm_to_vmem [thread:$0]  %s1, 256, %s39, [#allocation6], 128, 128, 8
    $region9: #{tpu_custom_call.1} parent=1 // pred_fallthru
      _
    // Predicated region
    $region10: #{tpu_custom_call.1} parent=1 // pred_check
      _
    $region11: #{tpu_custom_call.1} parent=1 // pred_check_branch
      %46 = sbr.rel (0) target = $region13
    $region12: #{tpu_custom_call.1} parent=1 // pred_region
      %s48 = ssub.s32 1024, 1024
      %49 = vsyncadd [#allocation6], %s48
      %s50 = sshll.u32 [#allocation7], 4
      %s51 = int_to_ptr.vmem [resolvable:$true] %s50
      %56 = dma.hbm_to_vmem [thread:$0]  %s2, 1024, %s51, [#allocation6], 64, 64, 4
    $region13: #{tpu_custom_call.1} parent=1 // pred_fallthru
      _
    // Predicated region
    $region14: #{tpu_custom_call.1} parent=1 // pred_check
      _
    $region15: #{tpu_custom_call.1} parent=1 // pred_check_branch
      %58 = sbr.rel (0) target = $region17
    $region16: #{tpu_custom_call.1} parent=1 // pred_region
      %s60 = ssub.s32 1024, 1024
      %61 = vsyncadd [#allocation9], %s60
      %s62 = sshll.u32 [#allocation8], 4
      %s63 = int_to_ptr.vmem [resolvable:$true] %s62
      %68 = dma.hbm_to_vmem [thread:$0]  %s3, 1024, %s63, [#allocation9], 64, 64, 4
    $region17: #{tpu_custom_call.1} parent=1 // pred_fallthru
      _
    // Predicated region
    $region18: #{tpu_custom_call.1} parent=1 // pred_check
      _
    $region19: #{tpu_custom_call.1} parent=1 // pred_check_branch
      %70 = sbr.rel (0) target = $region21
    $region20: #{tpu_custom_call.1} parent=1 // pred_region
      _
    $region21: #{tpu_custom_call.1} parent=1 // pred_fallthru
      _
    // Predicated region
    $region22: #{tpu_custom_call.1} parent=1 // pred_check
      _
    $region23: #{tpu_custom_call.1} parent=1 // pred_check_branch
      %72 = sbr.rel (0) target = $region25
    $region24: #{tpu_custom_call.1} parent=1 // pred_region
      %s74 = ssub.s32 1024, 1024
      %75 = vsyncadd [#allocation9], %s74
      %s76 = sshll.u32 [#allocation10], 4
      %s77 = int_to_ptr.vmem [resolvable:$true] %s76
      %82 = dma.hbm_to_vmem [thread:$0]  %s5, 1024, %s77, [#allocation9], 64, 64, 4
    $region25: #{tpu_custom_call.1} parent=1 // pred_fallthru
      _
    // Predicated region
    $region26: #{tpu_custom_call.1} parent=1 // pred_check
      _
    $region27: #{tpu_custom_call.1} parent=1 // pred_check_branch
      %84 = sbr.rel (0) target = $region29
    $region28: #{tpu_custom_call.1} parent=1 // pred_region
      %s86 = ssub.s32 1024, 1024
      %87 = vsyncadd [#allocation12], %s86
      %s88 = sshll.u32 [#allocation11], 4
      %s89 = int_to_ptr.vmem [resolvable:$true] %s88
      %94 = dma.hbm_to_vmem [thread:$0]  %s6, 1024, %s89, [#allocation12], 64, 64, 4
    $region29: #{tpu_custom_call.1} parent=1 // pred_fallthru
      _
    // Predicated region
    $region30: #{tpu_custom_call.1} parent=1 // pred_check
      _
    $region31: #{tpu_custom_call.1} parent=1 // pred_check_branch
      %96 = sbr.rel (0) target = $region33
    $region32: #{tpu_custom_call.1} parent=1 // pred_region
      _
    $region33: #{tpu_custom_call.1} parent=1 // pred_fallthru
      _
    // Predicated region
    $region34: #{tpu_custom_call.1} parent=1 // pred_check
      _
    $region35: #{tpu_custom_call.1} parent=1 // pred_check_branch
      %98 = sbr.rel (0) target = $region37
    $region36: #{tpu_custom_call.1} parent=1 // pred_region
      %s100 = ssub.s32 1024, 1024
      %101 = vsyncadd [#allocation12], %s100
      %s102 = sshll.u32 [#allocation13], 4
      %s103 = int_to_ptr.vmem [resolvable:$true] %s102
      %108 = dma.hbm_to_vmem [thread:$0]  %s8, 1024, %s103, [#allocation12], 64, 64, 4
    $region37: #{tpu_custom_call.1} parent=1 // pred_fallthru
      _
    // Predicated region
    $region38: #{tpu_custom_call.1} parent=1 // pred_check
      _
    $region39: #{tpu_custom_call.1} parent=1 // pred_check_branch
      %110 = sbr.rel (0) target = $region41
    $region40: #{tpu_custom_call.1} parent=1 // pred_region
      _
    $region41: #{tpu_custom_call.1} parent=1 // pred_fallthru
      _
    // Predicated region
    $region42: #{tpu_custom_call.1} parent=1 // pred_check
      _
    $region43: #{tpu_custom_call.1} parent=1 // pred_check_branch
      %112 = sbr.rel (0) target = $region45
    $region44: #{tpu_custom_call.1} parent=1 // pred_region
      %113 = dma.done [#allocation3], 64
    $region45: #{tpu_custom_call.1} parent=1 // pred_fallthru
      _
    // Predicated region
    $region46: #{tpu_custom_call.1} parent=1 // pred_check
      _
    $region47: #{tpu_custom_call.1} parent=1 // pred_check_branch
      %115 = sbr.rel (0) target = $region49
    $region48: #{tpu_custom_call.1} parent=1 // pred_region
      %116 = dma.done [#allocation6], 256
    $region49: #{tpu_custom_call.1} parent=1 // pred_fallthru
      _
    // Predicated region
    $region50: #{tpu_custom_call.1} parent=1 // pred_check
      _
    $region51: #{tpu_custom_call.1} parent=1 // pred_check_branch
      %118 = sbr.rel (0) target = $region53
    $region52: #{tpu_custom_call.1} parent=1 // pred_region
      %119 = dma.done [#allocation6], 1024
    $region53: #{tpu_custom_call.1} parent=1 // pred_fallthru
      _
    // Predicated region
    $region54: #{tpu_custom_call.1} parent=1 // pred_check
      _
    $region55: #{tpu_custom_call.1} parent=1 // pred_check_branch
      %121 = sbr.rel (0) target = $region57
    $region56: #{tpu_custom_call.1} parent=1 // pred_region
      %122 = dma.done [#allocation9], 1024
    $region57: #{tpu_custom_call.1} parent=1 // pred_fallthru
      _
    // Predicated region
    $region58: #{tpu_custom_call.1} parent=1 // pred_check
      _
    $region59: #{tpu_custom_call.1} parent=1 // pred_check_branch
      %124 = sbr.rel (0) target = $region61
    $region60: #{tpu_custom_call.1} parent=1 // pred_region
      %125 = dma.done [#allocation9], 1024
    $region61: #{tpu_custom_call.1} parent=1 // pred_fallthru
      _
    // Predicated region
    $region62: #{tpu_custom_call.1} parent=1 // pred_check
      _
    $region63: #{tpu_custom_call.1} parent=1 // pred_check_branch
      %127 = sbr.rel (0) target = $region65
    $region64: #{tpu_custom_call.1} parent=1 // pred_region
      %128 = dma.done [#allocation12], 1024
    $region65: #{tpu_custom_call.1} parent=1 // pred_fallthru
      _
    // Predicated region
    $region66: #{tpu_custom_call.1} parent=1 // pred_check
      _
    $region67: #{tpu_custom_call.1} parent=1 // pred_check_branch
      %130 = sbr.rel (0) target = $region69
    $region68: #{tpu_custom_call.1} parent=1 // pred_region
      %131 = dma.done [#allocation12], 1024
    $region69: #{tpu_custom_call.1} parent=1 // pred_fallthru
      _
    %v133 = vld [vmem:[#allocation2] sm:$0xf]
    %v134 = vld [vmem:[#allocation7] sm:$0xf]
    %v135 = vld [vmem:[#allocation7 + $0x4] sm:$0xf]
    %v136 = vld [vmem:[#allocation7 + $0x8] sm:$0xf]
    %v137 = vld [vmem:[#allocation7 + $0xc] sm:$0xf]
    %v138 = vld [vmem:[#allocation7 + $0x10] sm:$0xf]
    %v139 = vld [vmem:[#allocation7 + $0x14] sm:$0xf]
    %v140 = vld [vmem:[#allocation7 + $0x18] sm:$0xf]
    %v141 = vld [vmem:[#allocation7 + $0x1c] sm:$0xf]
    %v142 = vld [vmem:[#allocation7 + $0x20] sm:$0xf]
    %v143 = vld [vmem:[#allocation7 + $0x24] sm:$0xf]
    %v144 = vld [vmem:[#allocation7 + $0x28] sm:$0xf]
    %v145 = vld [vmem:[#allocation7 + $0x2c] sm:$0xf]
    %v146 = vld [vmem:[#allocation7 + $0x30] sm:$0xf]
    %v147 = vld [vmem:[#allocation7 + $0x34] sm:$0xf]
    %v148 = vld [vmem:[#allocation7 + $0x38] sm:$0xf]
    %v149 = vld [vmem:[#allocation7 + $0x3c] sm:$0xf]
    %v150 = vld [vmem:[#allocation5] sm:$0xff]
    %v151 = vpack.c.bf16 %v150, %v150
    %v152 = vld [vmem:[#allocation8] sm:$0xf]
    %v153 = vld [vmem:[#allocation8 + $0x4] sm:$0xf]
    %v154 = vld [vmem:[#allocation8 + $0x8] sm:$0xf]
    %v155 = vld [vmem:[#allocation8 + $0xc] sm:$0xf]
    %v156 = vld [vmem:[#allocation8 + $0x10] sm:$0xf]
    %v157 = vld [vmem:[#allocation8 + $0x14] sm:$0xf]
    %v158 = vld [vmem:[#allocation8 + $0x18] sm:$0xf]
    %v159 = vld [vmem:[#allocation8 + $0x1c] sm:$0xf]
    %v160 = vld [vmem:[#allocation8 + $0x20] sm:$0xf]
    %v161 = vld [vmem:[#allocation8 + $0x24] sm:$0xf]
    %v162 = vld [vmem:[#allocation8 + $0x28] sm:$0xf]
    %v163 = vld [vmem:[#allocation8 + $0x2c] sm:$0xf]
    %v164 = vld [vmem:[#allocation8 + $0x30] sm:$0xf]
    %v165 = vld [vmem:[#allocation8 + $0x34] sm:$0xf]
    %v166 = vld [vmem:[#allocation8 + $0x38] sm:$0xf]
    %v167 = vld [vmem:[#allocation8 + $0x3c] sm:$0xf]
    %v184 = vunpack.c.l.b16 %v152
    %v185 = vunpack.c.l.b16 %v153
    %v186 = vunpack.c.l.b16 %v154
    %v187 = vunpack.c.l.b16 %v155
    %v188 = vunpack.c.l.b16 %v156
    %v189 = vunpack.c.l.b16 %v157
    %v190 = vunpack.c.l.b16 %v158
    %v191 = vunpack.c.l.b16 %v159
    %v192 = vunpack.c.l.b16 %v160
    %v193 = vunpack.c.l.b16 %v161
    %v194 = vunpack.c.l.b16 %v162
    %v195 = vunpack.c.l.b16 %v163
    %v196 = vunpack.c.l.b16 %v164
    %v197 = vunpack.c.l.b16 %v165
    %v198 = vunpack.c.l.b16 %v166
    %v199 = vunpack.c.l.b16 %v167
    %v200 = vpack.c.b16 %v185, %v184
    %v201 = vpack.c.b16 %v187, %v186
    %v202 = vpack.c.b16 %v189, %v188
    %v203 = vpack.c.b16 %v191, %v190
    %v204 = vpack.c.b16 %v193, %v192
    %v205 = vpack.c.b16 %v195, %v194
    %v206 = vpack.c.b16 %v197, %v196
    %v207 = vpack.c.b16 %v199, %v198
    %216 = vmatprep.subr.bf16.mxu0 0
    %217 = vmatpush1.bf16.msra.mxu0 %v200
    %218 = vmatprep.subr.bf16.mxu0 0
    %219 = vmatpush1.bf16.msra.mxu0 %v201
    %220 = vmatprep.subr.bf16.mxu0 0
    %221 = vmatpush1.bf16.msra.mxu0 %v202
    %222 = vmatprep.subr.bf16.mxu0 0
    %223 = vmatpush1.bf16.msra.mxu0 %v203
    %224 = vmatprep.subr.bf16.mxu0 0
    %225 = vmatpush1.bf16.msra.mxu0 %v204
    %226 = vmatprep.subr.bf16.mxu0 0
    %227 = vmatpush1.bf16.msra.mxu0 %v205
    %228 = vmatprep.subr.bf16.mxu0 0
    %229 = vmatpush1.bf16.msra.mxu0 %v206
    %230 = vmatprep.subr.bf16.mxu0 0
    %231 = vmatpush1.bf16.msra.mxu0 %v207
    %232 = vmatprep.subr.bf16.mxu0 0
    %233 = vmatpush1.bf16.msra.mxu0 0
    %234 = vmatprep.subr.bf16.mxu0 0
    %235 = vmatpush1.bf16.msra.mxu0 0
    %236 = vmatprep.subr.bf16.mxu0 0
    %237 = vmatpush1.bf16.msra.mxu0 0
    %238 = vmatprep.subr.bf16.mxu0 0
    %239 = vmatpush1.bf16.msra.mxu0 0
    %240 = vmatprep.subr.bf16.mxu0 0
    %241 = vmatpush1.bf16.msra.mxu0 0
    %242 = vmatprep.subr.bf16.mxu0 0
    %243 = vmatpush1.bf16.msra.mxu0 0
    %244 = vmatprep.subr.bf16.mxu0 0
    %245 = vmatpush1.bf16.msra.mxu0 0
    %246 = vmatprep.subr.bf16.mxu0 0
    %247 = vmatpush1.bf16.msra.mxu0 0
    %248 = vmatprep.mubr.bf16.mxu0 0
    %249 = vmatmul.mubr.bf16.gmra.mrb[0].mxu0 %v151
    %v250 = vpop.f32.mrb[0].mxu0
    %v251 = vadd.f32 0.0, %v250
    %v252 = vpop.f32.mrb[0].mxu0
    %v253 = vpop.f32.mrb[0].mxu0
    %v254 = vpop.f32.mrb[0].mxu0
    %255 = vdwg.mxu0
    %v272 = vunpack.c.l.b16 %v134
    %v273 = vunpack.c.l.b16 %v135
    %v274 = vunpack.c.l.b16 %v136
    %v275 = vunpack.c.l.b16 %v137
    %v276 = vunpack.c.l.b16 %v138
    %v277 = vunpack.c.l.b16 %v139
    %v278 = vunpack.c.l.b16 %v140
    %v279 = vunpack.c.l.b16 %v141
    %v280 = vunpack.c.l.b16 %v142
    %v281 = vunpack.c.l.b16 %v143
    %v282 = vunpack.c.l.b16 %v144
    %v283 = vunpack.c.l.b16 %v145
    %v284 = vunpack.c.l.b16 %v146
    %v285 = vunpack.c.l.b16 %v147
    %v286 = vunpack.c.l.b16 %v148
    %v287 = vunpack.c.l.b16 %v149
    %v288 = vpack.c.b16 %v273, %v272
    %v289 = vpack.c.b16 %v275, %v274
    %v290 = vpack.c.b16 %v277, %v276
    %v291 = vpack.c.b16 %v279, %v278
    %v292 = vpack.c.b16 %v281, %v280
    %v293 = vpack.c.b16 %v283, %v282
    %v294 = vpack.c.b16 %v285, %v284
    %v295 = vpack.c.b16 %v287, %v286
    %304 = vmatprep.subr.bf16.mxu0 0
    %305 = vmatpush1.bf16.msra.mxu0 %v288
    %306 = vmatprep.subr.bf16.mxu0 0
    %307 = vmatpush1.bf16.msra.mxu0 %v289
    %308 = vmatprep.subr.bf16.mxu0 0
    %309 = vmatpush1.bf16.msra.mxu0 %v290
    %310 = vmatprep.subr.bf16.mxu0 0
    %311 = vmatpush1.bf16.msra.mxu0 %v291
    %312 = vmatprep.subr.bf16.mxu0 0
    %313 = vmatpush1.bf16.msra.mxu0 %v292
    %314 = vmatprep.subr.bf16.mxu0 0
    %315 = vmatpush1.bf16.msra.mxu0 %v293
    %316 = vmatprep.subr.bf16.mxu0 0
    %317 = vmatpush1.bf16.msra.mxu0 %v294
    %318 = vmatprep.subr.bf16.mxu0 0
    %319 = vmatpush1.bf16.msra.mxu0 %v295
    %320 = vmatprep.subr.bf16.mxu0 0
    %321 = vmatpush1.bf16.msra.mxu0 0
    %322 = vmatprep.subr.bf16.mxu0 0
    %323 = vmatpush1.bf16.msra.mxu0 0
    %324 = vmatprep.subr.bf16.mxu0 0
    %325 = vmatpush1.bf16.msra.mxu0 0
    %326 = vmatprep.subr.bf16.mxu0 0
    %327 = vmatpush1.bf16.msra.mxu0 0
    %328 = vmatprep.subr.bf16.mxu0 0
    %329 = vmatpush1.bf16.msra.mxu0 0
    %330 = vmatprep.subr.bf16.mxu0 0
    %331 = vmatpush1.bf16.msra.mxu0 0
    %332 = vmatprep.subr.bf16.mxu0 0
    %333 = vmatpush1.bf16.msra.mxu0 0
    %334 = vmatprep.subr.bf16.mxu0 0
    %335 = vmatpush1.bf16.msra.mxu0 0
    %336 = vmatprep.mubr.bf16.mxu0 0
    %337 = vmatmul.mubr.bf16.gmra.mrb[0].mxu0 %v133
    %v338 = vpop.f32.mrb[0].mxu0
    %v339 = vadd.f32 %v251, %v338
    %v340 = vpop.f32.mrb[0].mxu0
    %v341 = vpop.f32.mrb[0].mxu0
    %v342 = vpop.f32.mrb[0].mxu0
    %343 = vdwg.mxu0
    %v344 = vld [vmem:[%s4] sm:$0x1]
    %v346 = vlaneseq
    %v347 = vshrl.u32 %v346, 7
    %v348 = vsub.s32 0, %v347
    %v349 = vrot.slane %v344, %v348
    %v351 = vadd.f32 %v339, %v349
    %v352 = vtanh.pop %v351
    %353 = vst [vmem:[#allocation15] sm:$0xff] %v352
    %v354 = vpack.c.bf16 %v352, %v352
    %v355 = vld [vmem:[#allocation10] sm:$0xf]
    %v356 = vld [vmem:[#allocation10 + $0x4] sm:$0xf]
    %v357 = vld [vmem:[#allocation10 + $0x8] sm:$0xf]
    %v358 = vld [vmem:[#allocation10 + $0xc] sm:$0xf]
    %v359 = vld [vmem:[#allocation10 + $0x10] sm:$0xf]
    %v360 = vld [vmem:[#allocation10 + $0x14] sm:$0xf]
    %v361 = vld [vmem:[#allocation10 + $0x18] sm:$0xf]
    %v362 = vld [vmem:[#allocation10 + $0x1c] sm:$0xf]
    %v363 = vld [vmem:[#allocation10 + $0x20] sm:$0xf]
    %v364 = vld [vmem:[#allocation10 + $0x24] sm:$0xf]
    %v365 = vld [vmem:[#allocation10 + $0x28] sm:$0xf]
    %v366 = vld [vmem:[#allocation10 + $0x2c] sm:$0xf]
    %v367 = vld [vmem:[#allocation10 + $0x30] sm:$0xf]
    %v368 = vld [vmem:[#allocation10 + $0x34] sm:$0xf]
    %v369 = vld [vmem:[#allocation10 + $0x38] sm:$0xf]
    %v370 = vld [vmem:[#allocation10 + $0x3c] sm:$0xf]
    %s371 = scalar_lea.vmem [#allocation5], 8
    %v372 = vld [vmem:[%s371] sm:$0xff]
    %v373 = vpack.c.bf16 %v372, %v372
    %v374 = vld [vmem:[#allocation11] sm:$0xf]
    %v375 = vld [vmem:[#allocation11 + $0x4] sm:$0xf]
    %v376 = vld [vmem:[#allocation11 + $0x8] sm:$0xf]
    %v377 = vld [vmem:[#allocation11 + $0xc] sm:$0xf]
    %v378 = vld [vmem:[#allocation11 + $0x10] sm:$0xf]
    %v379 = vld [vmem:[#allocation11 + $0x14] sm:$0xf]
    %v380 = vld [vmem:[#allocation11 + $0x18] sm:$0xf]
    %v381 = vld [vmem:[#allocation11 + $0x1c] sm:$0xf]
    %v382 = vld [vmem:[#allocation11 + $0x20] sm:$0xf]
    %v383 = vld [vmem:[#allocation11 + $0x24] sm:$0xf]
    %v384 = vld [vmem:[#allocation11 + $0x28] sm:$0xf]
    %v385 = vld [vmem:[#allocation11 + $0x2c] sm:$0xf]
    %v386 = vld [vmem:[#allocation11 + $0x30] sm:$0xf]
    %v387 = vld [vmem:[#allocation11 + $0x34] sm:$0xf]
    %v388 = vld [vmem:[#allocation11 + $0x38] sm:$0xf]
    %v389 = vld [vmem:[#allocation11 + $0x3c] sm:$0xf]
    %v406 = vunpack.c.l.b16 %v374
    %v407 = vunpack.c.l.b16 %v375
    %v408 = vunpack.c.l.b16 %v376
    %v409 = vunpack.c.l.b16 %v377
    %v410 = vunpack.c.l.b16 %v378
    %v411 = vunpack.c.l.b16 %v379
    %v412 = vunpack.c.l.b16 %v380
    %v413 = vunpack.c.l.b16 %v381
    %v414 = vunpack.c.l.b16 %v382
    %v415 = vunpack.c.l.b16 %v383
    %v416 = vunpack.c.l.b16 %v384
    %v417 = vunpack.c.l.b16 %v385
    %v418 = vunpack.c.l.b16 %v386
    %v419 = vunpack.c.l.b16 %v387
    %v420 = vunpack.c.l.b16 %v388
    %v421 = vunpack.c.l.b16 %v389
    %v422 = vpack.c.b16 %v407, %v406
    %v423 = vpack.c.b16 %v409, %v408
    %v424 = vpack.c.b16 %v411, %v410
    %v425 = vpack.c.b16 %v413, %v412
    %v426 = vpack.c.b16 %v415, %v414
    %v427 = vpack.c.b16 %v417, %v416
    %v428 = vpack.c.b16 %v419, %v418
    %v429 = vpack.c.b16 %v421, %v420
    %438 = vmatprep.subr.bf16.mxu0 0
    %439 = vmatpush1.bf16.msra.mxu0 %v422
    %440 = vmatprep.subr.bf16.mxu0 0
    %441 = vmatpush1.bf16.msra.mxu0 %v423
    %442 = vmatprep.subr.bf16.mxu0 0
    %443 = vmatpush1.bf16.msra.mxu0 %v424
    %444 = vmatprep.subr.bf16.mxu0 0
    %445 = vmatpush1.bf16.msra.mxu0 %v425
    %446 = vmatprep.subr.bf16.mxu0 0
    %447 = vmatpush1.bf16.msra.mxu0 %v426
    %448 = vmatprep.subr.bf16.mxu0 0
    %449 = vmatpush1.bf16.msra.mxu0 %v427
    %450 = vmatprep.subr.bf16.mxu0 0
    %451 = vmatpush1.bf16.msra.mxu0 %v428
    %452 = vmatprep.subr.bf16.mxu0 0
    %453 = vmatpush1.bf16.msra.mxu0 %v429
    %454 = vmatprep.subr.bf16.mxu0 0
    %455 = vmatpush1.bf16.msra.mxu0 0
    %456 = vmatprep.subr.bf16.mxu0 0
    %457 = vmatpush1.bf16.msra.mxu0 0
    %458 = vmatprep.subr.bf16.mxu0 0
    %459 = vmatpush1.bf16.msra.mxu0 0
    %460 = vmatprep.subr.bf16.mxu0 0
    %461 = vmatpush1.bf16.msra.mxu0 0
    %462 = vmatprep.subr.bf16.mxu0 0
    %463 = vmatpush1.bf16.msra.mxu0 0
    %464 = vmatprep.subr.bf16.mxu0 0
    %465 = vmatpush1.bf16.msra.mxu0 0
    %466 = vmatprep.subr.bf16.mxu0 0
    %467 = vmatpush1.bf16.msra.mxu0 0
    %468 = vmatprep.subr.bf16.mxu0 0
    %469 = vmatpush1.bf16.msra.mxu0 0
    %470 = vmatprep.mubr.bf16.mxu0 0
    %471 = vmatmul.mubr.bf16.gmra.mrb[0].mxu0 %v373
    %v472 = vpop.f32.mrb[0].mxu0
    %v473 = vadd.f32 0.0, %v472
    %v474 = vpop.f32.mrb[0].mxu0
    %v475 = vpop.f32.mrb[0].mxu0
    %v476 = vpop.f32.mrb[0].mxu0
    %477 = vdwg.mxu0
    %v494 = vunpack.c.l.b16 %v355
    %v495 = vunpack.c.l.b16 %v356
    %v496 = vunpack.c.l.b16 %v357
    %v497 = vunpack.c.l.b16 %v358
    %v498 = vunpack.c.l.b16 %v359
    %v499 = vunpack.c.l.b16 %v360
    %v500 = vunpack.c.l.b16 %v361
    %v501 = vunpack.c.l.b16 %v362
    %v502 = vunpack.c.l.b16 %v363
    %v503 = vunpack.c.l.b16 %v364
    %v504 = vunpack.c.l.b16 %v365
    %v505 = vunpack.c.l.b16 %v366
    %v506 = vunpack.c.l.b16 %v367
    %v507 = vunpack.c.l.b16 %v368
    %v508 = vunpack.c.l.b16 %v369
    %v509 = vunpack.c.l.b16 %v370
    %v510 = vpack.c.b16 %v495, %v494
    %v511 = vpack.c.b16 %v497, %v496
    %v512 = vpack.c.b16 %v499, %v498
    %v513 = vpack.c.b16 %v501, %v500
    %v514 = vpack.c.b16 %v503, %v502
    %v515 = vpack.c.b16 %v505, %v504
    %v516 = vpack.c.b16 %v507, %v506
    %v517 = vpack.c.b16 %v509, %v508
    %526 = vmatprep.subr.bf16.mxu0 0
    %527 = vmatpush1.bf16.msra.mxu0 %v510
    %528 = vmatprep.subr.bf16.mxu0 0
    %529 = vmatpush1.bf16.msra.mxu0 %v511
    %530 = vmatprep.subr.bf16.mxu0 0
    %531 = vmatpush1.bf16.msra.mxu0 %v512
    %532 = vmatprep.subr.bf16.mxu0 0
    %533 = vmatpush1.bf16.msra.mxu0 %v513
    %534 = vmatprep.subr.bf16.mxu0 0
    %535 = vmatpush1.bf16.msra.mxu0 %v514
    %536 = vmatprep.subr.bf16.mxu0 0
    %537 = vmatpush1.bf16.msra.mxu0 %v515
    %538 = vmatprep.subr.bf16.mxu0 0
    %539 = vmatpush1.bf16.msra.mxu0 %v516
    %540 = vmatprep.subr.bf16.mxu0 0
    %541 = vmatpush1.bf16.msra.mxu0 %v517
    %542 = vmatprep.subr.bf16.mxu0 0
    %543 = vmatpush1.bf16.msra.mxu0 0
    %544 = vmatprep.subr.bf16.mxu0 0
    %545 = vmatpush1.bf16.msra.mxu0 0
    %546 = vmatprep.subr.bf16.mxu0 0
    %547 = vmatpush1.bf16.msra.mxu0 0
    %548 = vmatprep.subr.bf16.mxu0 0
    %549 = vmatpush1.bf16.msra.mxu0 0
    %550 = vmatprep.subr.bf16.mxu0 0
    %551 = vmatpush1.bf16.msra.mxu0 0
    %552 = vmatprep.subr.bf16.mxu0 0
    %553 = vmatpush1.bf16.msra.mxu0 0
    %554 = vmatprep.subr.bf16.mxu0 0
    %555 = vmatpush1.bf16.msra.mxu0 0
    %556 = vmatprep.subr.bf16.mxu0 0
    %557 = vmatpush1.bf16.msra.mxu0 0
    %558 = vmatprep.mubr.bf16.mxu0 0
    %559 = vmatmul.mubr.bf16.gmra.mrb[0].mxu0 %v354
    %v560 = vpop.f32.mrb[0].mxu0
    %v561 = vadd.f32 %v473, %v560
    %v562 = vpop.f32.mrb[0].mxu0
    %v563 = vpop.f32.mrb[0].mxu0
    %v564 = vpop.f32.mrb[0].mxu0
    %565 = vdwg.mxu0
    %v566 = vld [vmem:[%s7] sm:$0x1]
    %v568 = vlaneseq
    %v569 = vshrl.u32 %v568, 7
    %v570 = vsub.s32 0, %v569
    %v571 = vrot.slane %v566, %v570
    %v573 = vadd.f32 %v561, %v571
    %v574 = vtanh.pop %v573
    %s575 = scalar_lea.vmem [#allocation15], 8
    %576 = vst [vmem:[%s575] sm:$0xff] %v574
    %v577 = vpack.c.bf16 %v574, %v574
    %v578 = vld [vmem:[%s9] sm:$0x1]
    %v579 = vld [vmem:[#allocation13] sm:$0xf]
    %v580 = vld [vmem:[#allocation13 + $0x4] sm:$0xf]
    %v581 = vld [vmem:[#allocation13 + $0x8] sm:$0xf]
    %v582 = vld [vmem:[#allocation13 + $0xc] sm:$0xf]
    %v583 = vld [vmem:[#allocation13 + $0x10] sm:$0xf]
    %v584 = vld [vmem:[#allocation13 + $0x14] sm:$0xf]
    %v585 = vld [vmem:[#allocation13 + $0x18] sm:$0xf]
    %v586 = vld [vmem:[#allocation13 + $0x1c] sm:$0xf]
    %v587 = vld [vmem:[#allocation13 + $0x20] sm:$0xf]
    %v588 = vld [vmem:[#allocation13 + $0x24] sm:$0xf]
    %v589 = vld [vmem:[#allocation13 + $0x28] sm:$0xf]
    %v590 = vld [vmem:[#allocation13 + $0x2c] sm:$0xf]
    %v591 = vld [vmem:[#allocation13 + $0x30] sm:$0xf]
    %v592 = vld [vmem:[#allocation13 + $0x34] sm:$0xf]
    %v593 = vld [vmem:[#allocation13 + $0x38] sm:$0xf]
    %v594 = vld [vmem:[#allocation13 + $0x3c] sm:$0xf]
    %v611 = vunpack.c.l.b16 %v579
    %v612 = vunpack.c.l.b16 %v580
    %v613 = vunpack.c.l.b16 %v581
    %v614 = vunpack.c.l.b16 %v582
    %v615 = vunpack.c.l.b16 %v583
    %v616 = vunpack.c.l.b16 %v584
    %v617 = vunpack.c.l.b16 %v585
    %v618 = vunpack.c.l.b16 %v586
    %v619 = vunpack.c.l.b16 %v587
    %v620 = vunpack.c.l.b16 %v588
    %v621 = vunpack.c.l.b16 %v589
    %v622 = vunpack.c.l.b16 %v590
    %v623 = vunpack.c.l.b16 %v591
    %v624 = vunpack.c.l.b16 %v592
    %v625 = vunpack.c.l.b16 %v593
    %v626 = vunpack.c.l.b16 %v594
    %v627 = vpack.c.b16 %v612, %v611
    %v628 = vpack.c.b16 %v614, %v613
    %v629 = vpack.c.b16 %v616, %v615
    %v630 = vpack.c.b16 %v618, %v617
    %v631 = vpack.c.b16 %v620, %v619
    %v632 = vpack.c.b16 %v622, %v621
    %v633 = vpack.c.b16 %v624, %v623
    %v634 = vpack.c.b16 %v626, %v625
    %643 = vmatprep.subr.bf16.mxu0 0
    %644 = vmatpush1.bf16.msra.mxu0 %v627
    %645 = vmatprep.subr.bf16.mxu0 0
    %646 = vmatpush1.bf16.msra.mxu0 %v628
    %647 = vmatprep.subr.bf16.mxu0 0
    %648 = vmatpush1.bf16.msra.mxu0 %v629
    %649 = vmatprep.subr.bf16.mxu0 0
    %650 = vmatpush1.bf16.msra.mxu0 %v630
    %651 = vmatprep.subr.bf16.mxu0 0
    %652 = vmatpush1.bf16.msra.mxu0 %v631
    %653 = vmatprep.subr.bf16.mxu0 0
    %654 = vmatpush1.bf16.msra.mxu0 %v632
    %655 = vmatprep.subr.bf16.mxu0 0
    %656 = vmatpush1.bf16.msra.mxu0 %v633
    %657 = vmatprep.subr.bf16.mxu0 0
    %658 = vmatpush1.bf16.msra.mxu0 %v634
    %659 = vmatprep.subr.bf16.mxu0 0
    %660 = vmatpush1.bf16.msra.mxu0 0
    %661 = vmatprep.subr.bf16.mxu0 0
    %662 = vmatpush1.bf16.msra.mxu0 0
    %663 = vmatprep.subr.bf16.mxu0 0
    %664 = vmatpush1.bf16.msra.mxu0 0
    %665 = vmatprep.subr.bf16.mxu0 0
    %666 = vmatpush1.bf16.msra.mxu0 0
    %667 = vmatprep.subr.bf16.mxu0 0
    %668 = vmatpush1.bf16.msra.mxu0 0
    %669 = vmatprep.subr.bf16.mxu0 0
    %670 = vmatpush1.bf16.msra.mxu0 0
    %671 = vmatprep.subr.bf16.mxu0 0
    %672 = vmatpush1.bf16.msra.mxu0 0
    %673 = vmatprep.subr.bf16.mxu0 0
    %674 = vmatpush1.bf16.msra.mxu0 0
    %675 = vmatprep.mubr.bf16.mxu0 0
    %676 = vmatmul.mubr.bf16.gmra.mrb[0].mxu0 %v577
    %v677 = vpop.f32.mrb[0].mxu0
    %v678 = vadd.f32 0.0, %v677
    %v679 = vpop.f32.mrb[0].mxu0
    %v680 = vpop.f32.mrb[0].mxu0
    %v681 = vpop.f32.mrb[0].mxu0
    %682 = vdwg.mxu0
    %v684 = vlaneseq
    %v685 = vshrl.u32 %v684, 7
    %v686 = vsub.s32 0, %v685
    %v687 = vrot.slane %v578, %v686
    %v689 = vadd.f32 %v687, %v678
    %690 = vst [vmem:[#allocation14] sm:$0xff] %v689
    // Predicated region
    $region70: #{tpu_custom_call.1} parent=1 // pred_check
      _
    $region71: #{tpu_custom_call.1} parent=1 // pred_check_branch
      %692 = sbr.rel (0) target = $region73
    $region72: #{tpu_custom_call.1} parent=1 // pred_region
      %s694 = ssub.s32 128, 128
      %695 = vsyncadd [#allocation4], %s694
      %s697 = sshll.u32 [#allocation14], 4
      %s698 = int_to_ptr.vmem [resolvable:$true] %s697
      %700 = dma.vmem_to_hbm [thread:$0]  %s698, 128, %s10, [#allocation4]
    $region73: #{tpu_custom_call.1} parent=1 // pred_fallthru
      _
    // Predicated region
    $region74: #{tpu_custom_call.1} parent=1 // pred_check
      _
    $region75: #{tpu_custom_call.1} parent=1 // pred_check_branch
      %702 = sbr.rel (0) target = $region77
    $region76: #{tpu_custom_call.1} parent=1 // pred_region
      %s704 = ssub.s32 256, 256
      %705 = vsyncadd [#allocation16], %s704
      %s706 = sshll.u32 [#allocation15], 4
      %s707 = int_to_ptr.vmem [resolvable:$true] %s706
      %712 = dma.vmem_to_hbm [thread:$0]  %s707, 256, %s11, [#allocation16], 128, 128, 8
    $region77: #{tpu_custom_call.1} parent=1 // pred_fallthru
      _
    // Predicated region
    $region78: #{tpu_custom_call.1} parent=1 // pred_check
      _
    $region79: #{tpu_custom_call.1} parent=1 // pred_check_branch
      %714 = sbr.rel (0) target = $region81
    $region80: #{tpu_custom_call.1} parent=1 // pred_region
      %715 = dma.done [#allocation4], 128
    $region81: #{tpu_custom_call.1} parent=1 // pred_fallthru
      _
    // Predicated region
    $region82: #{tpu_custom_call.1} parent=1 // pred_check
      _
    $region83: #{tpu_custom_call.1} parent=1 // pred_check_branch
      %717 = sbr.rel (0) target = $region85
    $region84: #{tpu_custom_call.1} parent=1 // pred_region
      %718 = dma.done [#allocation16], 256
    $region85: #{tpu_custom_call.1} parent=1 // pred_fallthru
      _
    %719 = vsyncpa [#allocation3], 1
    %720 = vsyncpa [#allocation6], 1
    %721 = vsyncpa [#allocation9], 1
    %722 = vsyncpa [#allocation12], 1
    %723 = vsyncpa [#allocation4], 1
    %724 = vsyncpa [#allocation16], 1

</llo_original>
